<compile_context>
chip_gen: v5e
topology: v5e:2x2
jax: 0.10.0
libtpu: 0.0.40
codegen_flags: <defaults>
</compile_context>

<pallas_src>
import functools

import jax
import jax.numpy as jnp
from jax.experimental import pallas as pl
from jax.experimental.pallas import tpu as pltpu


def _coupling_kernel(x_ref, w1_ref, b1_ref, w2_ref, b2_ref, w3_ref, b3_ref,
                     y_ref, ld_ref, *, direct, hidden, num_inputs):
    x = x_ref[...]                              # (TB, D) in the MXU feed dtype
    xf = x.astype(jnp.float32)

    # Branch selector over the concatenated hidden axis:
    #   cols [0, H)  -> scale branch  (tanh)
    #   cols [H, 2H) -> translate branch (relu)
    col = jax.lax.broadcasted_iota(jnp.int32, (x.shape[0], 2 * hidden), 1)
    is_scale = col < hidden

    # ---- layer 1 (input mask folded into W1; scale||translate concatenated) --
    z = jnp.dot(x, w1_ref[...], preferred_element_type=jnp.float32) + b1_ref[...]
    h = jnp.where(is_scale, jnp.tanh(z), jnp.maximum(z, 0.0)).astype(x.dtype)

    # ---- layer 2 (block-diagonal W2 keeps the two branches independent) ------
    z = jnp.dot(h, w2_ref[...], preferred_element_type=jnp.float32) + b2_ref[...]
    h = jnp.where(is_scale, jnp.tanh(z), jnp.maximum(z, 0.0)).astype(x.dtype)

    # ---- layer 3 (block-diagonal W3 with (1-mask) folded into W3/b3) ---------
    z3 = jnp.dot(h, w3_ref[...], preferred_element_type=jnp.float32) + b3_ref[...]
    log_s = z3[:, :num_inputs]                  # scale-branch outputs
    t = z3[:, num_inputs:]                      # translate-branch outputs

    # ---- affine coupling + log-determinant -----------------------------------
    if direct:
        y = xf * jnp.exp(log_s) + t
        ld = jnp.sum(log_s, axis=-1, keepdims=True)
    else:
        y = (xf - t) * jnp.exp(-log_s)
        ld = -jnp.sum(log_s, axis=-1, keepdims=True)

    y_ref[...] = y.astype(y_ref.dtype)
    ld_ref[...] = ld.astype(ld_ref.dtype)


def _round_up(n, m):
    return (n + m - 1) // m * m


def coupling_layer(inputs, mask, scale_params, translate_params,
                   mode="direct", cond_inputs=None, block_b=1024):
    """Pallas forward of the RealNVP CouplingLayer.

    inputs:                         (B, D)
    mask:                           (D,) binary mask
    scale_params/translate_params:  tuples (w1, b1, w2, b2, w3, b3) in PyTorch
                                    nn.Linear layout: w (out, in), b (out,)
    Returns (outputs (B, D), logdet (B, 1)).
    """
    if mode not in ("direct", "inverse"):
        raise ValueError(f"mode must be 'direct' or 'inverse', got {mode!r}")
    del cond_inputs  # accepted but unused by the reference forward

    B, D = inputs.shape
    H = scale_params[0].shape[0]
    out_dtype = inputs.dtype
    # Feed the MXU in the activation dtype (bf16 inputs -> native bf16 MXU on
    # v6e/v7x).  Biases + all elementwise math stay f32 (v5e-friendly), and
    # matmuls accumulate in f32 via preferred_element_type.
    mxu_dtype = inputs.dtype

    maskf = mask.astype(jnp.float32).reshape(D)
    omm = 1.0 - maskf

    def prep_net(params):
        w1, b1, w2, b2, w3, b3 = params
        # (out,in) -> (in,out); fold x*mask into W1 and *(1-mask) into W3/b3:
        #   (x*mask) @ W1.T           == x @ (mask[:,None] * W1.T)
        #   (h @ W3.T + b3)*(1-mask)  == h @ (W3.T * (1-mask)) + b3*(1-mask)
        w1t = w1.T.astype(jnp.float32) * maskf[:, None]
        w2t = w2.T.astype(jnp.float32)
        w3t = w3.T.astype(jnp.float32) * omm[None, :]
        return (w1t, b1.astype(jnp.float32),
                w2t, b2.astype(jnp.float32),
                w3t, b3.astype(jnp.float32) * omm)

    sw1, sb1, sw2, sb2, sw3, sb3 = prep_net(scale_params)
    tw1, tb1, tw2, tb2, tw3, tb3 = prep_net(translate_params)

    # Concatenate the two nets: layer-1 side-by-side, layers 2/3 block-diagonal.
    z_hh = jnp.zeros((H, H), jnp.float32)
    z_hd = jnp.zeros((H, D), jnp.float32)
    w1c = jnp.concatenate([sw1, tw1], axis=1).astype(mxu_dtype)            # (D, 2H)
    b1c = jnp.concatenate([sb1, tb1]).reshape(1, 2 * H)                    # (1, 2H)
    w2c = jnp.concatenate(
        [jnp.concatenate([sw2, z_hh], axis=1),
         jnp.concatenate([z_hh, tw2], axis=1)], axis=0).astype(mxu_dtype)  # (2H, 2H)
    b2c = jnp.concatenate([sb2, tb2]).reshape(1, 2 * H)                    # (1, 2H)
    w3c = jnp.concatenate(
        [jnp.concatenate([sw3, z_hd], axis=1),
         jnp.concatenate([z_hd, tw3], axis=1)], axis=0).astype(mxu_dtype)  # (2H, 2D)
    b3c = jnp.concatenate([sb3, tb3]).reshape(1, 2 * D)                    # (1, 2D)

    # Batch tiling: large tiles amortize per-grid-step overhead; cap TB so the
    # grid has >= 2 steps whenever B allows it (both v7x TensorCores get work).
    Bp8 = _round_up(B, 8)
    TB = min(block_b, Bp8)
    if Bp8 >= 16:
        TB = min(TB, _round_up(pl.cdiv(Bp8, 2), 8))
    TB = max(8, TB)
    Bp = _round_up(B, TB)
    x = inputs if Bp == B else jnp.pad(inputs, ((0, Bp - B), (0, 0)))
    grid = (Bp // TB,)

    batch_spec = pl.BlockSpec((TB, D), lambda i: (i, 0))

    def resident(a):  # whole-array block, same index every step -> fetched once
        return pl.BlockSpec(a.shape, lambda i: (0, 0))

    weights = (w1c, b1c, w2c, b2c, w3c, b3c)
    in_specs = [batch_spec] + [resident(a) for a in weights]
    out_specs = (batch_spec, pl.BlockSpec((TB, 1), lambda i: (i, 0)))
    out_shape = (jax.ShapeDtypeStruct((Bp, D), out_dtype),
                 jax.ShapeDtypeStruct((Bp, 1), jnp.float32))

    # Advisory cost estimate so XLA schedules neighbours around the call.
    act_bytes = jnp.dtype(mxu_dtype).itemsize
    flops = 2 * Bp * (D * 2 * H + 4 * H * H + 4 * H * D) + 12 * Bp * D
    transc = Bp * (4 * H + D)                      # two tanh slabs + exp
    bytes_acc = (2 * Bp * D * act_bytes + Bp * 4
                 + sum(int(a.size) * jnp.dtype(a.dtype).itemsize for a in weights))

    kern = functools.partial(_coupling_kernel, direct=(mode == "direct"),
                             hidden=H, num_inputs=D)
    y, ld = pl.pallas_call(
        kern,
        grid=grid,
        in_specs=in_specs,
        out_specs=out_specs,
        out_shape=out_shape,
        compiler_params=pltpu.CompilerParams(
            dimension_semantics=("parallel",)),
        cost_estimate=pl.CostEstimate(flops=flops, transcendentals=transc,
                                      bytes_accessed=bytes_acc),
    )(x, *weights)
    return y[:B], ld[:B]


# ------------------------- pure-JAX reference ---------------------------------
def _ref_coupling(inputs, mask, scale_params, translate_params, mode):
    maskf = mask.astype(jnp.float32)

    def net(x, params, act):
        w1, b1, w2, b2, w3, b3 = params
        h = act(x @ w1.T + b1)
        h = act(h @ w2.T + b2)
        return h @ w3.T + b3

    xm = inputs * maskf
    log_s = net(xm, scale_params, jnp.tanh) * (1.0 - maskf)
    t = net(xm, translate_params, jax.nn.relu) * (1.0 - maskf)
    if mode == "direct":
        return inputs * jnp.exp(log_s) + t, jnp.sum(log_s, -1, keepdims=True)
    else:
        return (inputs - t) * jnp.exp(-log_s), -jnp.sum(log_s, -1, keepdims=True)


if __name__ == "__main__":
    B, D, H = 16, 8, 32  # batch, num_inputs, num_hidden

    key = jax.random.PRNGKey(0)
    keys = jax.random.split(key, 14)

    x = jax.random.normal(keys[0], (B, D), dtype=jnp.float32)
    mask = (jnp.arange(D) % 2).astype(jnp.float32)  # checkerboard mask

    def make_linear(kw, kb, fan_in, fan_out):
        bound = 1.0 / (fan_in ** 0.5)
        w = jax.random.uniform(kw, (fan_out, fan_in), minval=-bound, maxval=bound,
                               dtype=jnp.float32)
        b = jax.random.uniform(kb, (fan_out,), minval=-bound, maxval=bound,
                               dtype=jnp.float32)
        return w, b

    sw1, sb1 = make_linear(keys[1], keys[2], D, H)
    sw2, sb2 = make_linear(keys[3], keys[4], H, H)
    sw3, sb3 = make_linear(keys[5], keys[6], H, D)
    tw1, tb1 = make_linear(keys[7], keys[8], D, H)
    tw2, tb2 = make_linear(keys[9], keys[10], H, H)
    tw3, tb3 = make_linear(keys[11], keys[12], H, D)

    scale_params = (sw1, sb1, sw2, sb2, sw3, sb3)
    translate_params = (tw1, tb1, tw2, tb2, tw3, tb3)

    # --- direct mode (f32, tight tolerance) ---
    y, ld = coupling_layer(x, mask, scale_params, translate_params, mode="direct")
    y = jax.block_until_ready(y)
    ld = jax.block_until_ready(ld)
    y_ref, ld_ref = _ref_coupling(x, mask, scale_params, translate_params, "direct")
    assert y.shape == (B, D) and ld.shape == (B, 1)
    assert jnp.allclose(y, y_ref, atol=1e-4, rtol=1e-4), "direct output mismatch"
    assert jnp.allclose(ld, ld_ref, atol=1e-4, rtol=1e-4), "direct logdet mismatch"

    # --- inverse mode (and round-trip invertibility) ---
    x_rec, ld_inv = coupling_layer(y, mask, scale_params, translate_params,
                                   mode="inverse")
    x_rec = jax.block_until_ready(x_rec)
    ld_inv = jax.block_until_ready(ld_inv)
    yi_ref, ldi_ref = _ref_coupling(y, mask, scale_params, translate_params,
                                    "inverse")
    assert jnp.allclose(x_rec, yi_ref, atol=1e-4, rtol=1e-4), "inverse output mismatch"
    assert jnp.allclose(ld_inv, ldi_ref, atol=1e-4, rtol=1e-4), "inverse logdet mismatch"
    assert jnp.allclose(x_rec, x, atol=1e-3, rtol=1e-3), "round-trip mismatch"

    # --- bf16 fast-MXU path smoke test (loose tolerance, f32 reference) ---
    yb, ldb = coupling_layer(x.astype(jnp.bfloat16), mask, scale_params,
                             translate_params, mode="direct")
    yb = jax.block_until_ready(yb)
    ldb = jax.block_until_ready(ldb)
    assert yb.dtype == jnp.bfloat16 and yb.shape == (B, D)
    assert bool(jnp.all(jnp.isfinite(yb.astype(jnp.float32))))
    assert jnp.allclose(yb.astype(jnp.float32), y_ref, atol=0.3, rtol=0.1), \
        "bf16 output mismatch"
    assert jnp.allclose(ldb, ld_ref, atol=0.3, rtol=0.1), "bf16 logdet mismatch"

    print("KERNEL_OK")
</pallas_src>

<mosaic_0001>
module attributes {stable_mosaic.version = 11 : i64} {
  func.func @_coupling_kernel(%arg0: i32, %arg1: memref<8x8xf32, #tpu.memory_space<vmem>>, %arg2: memref<8x64xf32, #tpu.memory_space<vmem>>, %arg3: memref<1x64xf32, #tpu.memory_space<vmem>>, %arg4: memref<64x64xf32, #tpu.memory_space<vmem>>, %arg5: memref<1x64xf32, #tpu.memory_space<vmem>>, %arg6: memref<64x16xf32, #tpu.memory_space<vmem>>, %arg7: memref<1x16xf32, #tpu.memory_space<vmem>>, %arg8: memref<8x8xf32, #tpu.memory_space<vmem>>, %arg9: memref<8x1xf32, #tpu.memory_space<vmem>>) attributes {dimension_semantics = [#tpu.dimension_semantics<parallel>], iteration_bounds = array<i64: 2>, scalar_prefetch = 0 : i64, scratch_operands = 0 : i64, tpu.core_type = #tpu.core_type<tc>, window_params = [{transform_indices = @transform_0, window_bounds = array<i64: 8, 8>}, {pipeline_mode = #tpu.pipeline_mode<synchronous>, transform_indices = @transform_1, window_bounds = array<i64: 8, 64>}, {pipeline_mode = #tpu.pipeline_mode<synchronous>, transform_indices = @transform_2, window_bounds = array<i64: 1, 64>}, {pipeline_mode = #tpu.pipeline_mode<synchronous>, transform_indices = @transform_3, window_bounds = array<i64: 64, 64>}, {pipeline_mode = #tpu.pipeline_mode<synchronous>, transform_indices = @transform_4, window_bounds = array<i64: 1, 64>}, {pipeline_mode = #tpu.pipeline_mode<synchronous>, transform_indices = @transform_5, window_bounds = array<i64: 64, 16>}, {pipeline_mode = #tpu.pipeline_mode<synchronous>, transform_indices = @transform_6, window_bounds = array<i64: 1, 16>}, {transform_indices = @transform_7, window_bounds = array<i64: 8, 8>}, {transform_indices = @transform_8, window_bounds = array<i64: 8, 1>}]} {
    %c0 = arith.constant 0 : index
    %c0_0 = arith.constant 0 : index
    %0 = vector.load %arg1[%c0, %c0_0] : memref<8x8xf32, #tpu.memory_space<vmem>>, vector<8x8xf32>
    %1 = tpu.iota {dimensions = array<i32: 1>} : vector<8x64xi32>
    %c32_i32 = arith.constant 32 : i32
    %2 = vector.broadcast %c32_i32 : i32 to vector<8x64xi32>
    %3 = arith.cmpi slt, %1, %2 : vector<8x64xi32>
    %c0_1 = arith.constant 0 : index
    %c0_2 = arith.constant 0 : index
    %4 = vector.load %arg2[%c0_1, %c0_2] : memref<8x64xf32, #tpu.memory_space<vmem>>, vector<8x64xf32>
    %cst = arith.constant dense<0.000000e+00> : vector<8x64xf32>
    %5 = tpu.matmul %0, %4, %cst {dimension_numbers = #tpu.dot_dimension_numbers<[1], [0], [0], [1], [0, 0, 1, 1], [], []>} : vector<8x8xf32>, vector<8x64xf32>, vector<8x64xf32> -> vector<8x64xf32>
    %c0_3 = arith.constant 0 : index
    %c0_4 = arith.constant 0 : index
    %6 = vector.load %arg3[%c0_3, %c0_4] : memref<1x64xf32, #tpu.memory_space<vmem>>, vector<1x64xf32>
    %7 = vector.broadcast %6 : vector<1x64xf32> to vector<8x64xf32>
    %8 = arith.addf %5, %7 : vector<8x64xf32>
    %9 = math.tanh %8 : vector<8x64xf32>
    %cst_5 = arith.constant 0.000000e+00 : f32
    %10 = vector.broadcast %cst_5 : f32 to vector<8x64xf32>
    %11 = arith.maximumf %8, %10 : vector<8x64xf32>
    %12 = arith.select %3, %9, %11 : vector<8x64xi1>, vector<8x64xf32>
    %c0_6 = arith.constant 0 : index
    %c0_7 = arith.constant 0 : index
    %13 = vector.load %arg4[%c0_6, %c0_7] : memref<64x64xf32, #tpu.memory_space<vmem>>, vector<64x64xf32>
    %cst_8 = arith.constant dense<0.000000e+00> : vector<8x64xf32>
    %14 = tpu.matmul %12, %13, %cst_8 {dimension_numbers = #tpu.dot_dimension_numbers<[1], [0], [0], [1], [0, 0, 1, 1], [], []>} : vector<8x64xf32>, vector<64x64xf32>, vector<8x64xf32> -> vector<8x64xf32>
    %c0_9 = arith.constant 0 : index
    %c0_10 = arith.constant 0 : index
    %15 = vector.load %arg5[%c0_9, %c0_10] : memref<1x64xf32, #tpu.memory_space<vmem>>, vector<1x64xf32>
    %16 = vector.broadcast %15 : vector<1x64xf32> to vector<8x64xf32>
    %17 = arith.addf %14, %16 : vector<8x64xf32>
    %18 = math.tanh %17 : vector<8x64xf32>
    %cst_11 = arith.constant 0.000000e+00 : f32
    %19 = vector.broadcast %cst_11 : f32 to vector<8x64xf32>
    %20 = arith.maximumf %17, %19 : vector<8x64xf32>
    %21 = arith.select %3, %18, %20 : vector<8x64xi1>, vector<8x64xf32>
    %c0_12 = arith.constant 0 : index
    %c0_13 = arith.constant 0 : index
    %22 = vector.load %arg6[%c0_12, %c0_13] : memref<64x16xf32, #tpu.memory_space<vmem>>, vector<64x16xf32>
    %cst_14 = arith.constant dense<0.000000e+00> : vector<8x16xf32>
    %23 = tpu.matmul %21, %22, %cst_14 {dimension_numbers = #tpu.dot_dimension_numbers<[1], [0], [0], [1], [0, 0, 1, 1], [], []>} : vector<8x64xf32>, vector<64x16xf32>, vector<8x16xf32> -> vector<8x16xf32>
    %c0_15 = arith.constant 0 : index
    %c0_16 = arith.constant 0 : index
    %24 = vector.load %arg7[%c0_15, %c0_16] : memref<1x16xf32, #tpu.memory_space<vmem>>, vector<1x16xf32>
    %25 = vector.broadcast %24 : vector<1x16xf32> to vector<8x16xf32>
    %26 = arith.addf %23, %25 : vector<8x16xf32>
    %27 = vector.extract_strided_slice %26 {offsets = [0, 0], sizes = [8, 8], strides = [1, 1]} : vector<8x16xf32> to vector<8x8xf32>
    %28 = vector.extract_strided_slice %26 {offsets = [0, 8], sizes = [8, 8], strides = [1, 1]} : vector<8x16xf32> to vector<8x8xf32>
    %29 = math.exp %27 : vector<8x8xf32>
    %30 = arith.mulf %0, %29 : vector<8x8xf32>
    %31 = arith.addf %30, %28 : vector<8x8xf32>
    %cst_17 = arith.constant dense<0.000000e+00> : vector<8xf32>
    %32 = vector.multi_reduction <add>, %27, %cst_17 [1] : vector<8x8xf32> to vector<8xf32>
    %33 = vector.shape_cast %32 : vector<8xf32> to vector<8x1xf32>
    %c0_18 = arith.constant 0 : index
    %c0_19 = arith.constant 0 : index
    %34 = vector.load %arg8[%c0_18, %c0_19] : memref<8x8xf32, #tpu.memory_space<vmem>>, vector<8x8xf32>
    tpu.vector_store %arg8[%c0_18, %c0_19], %31 {strides = array<i32>} : memref<8x8xf32, #tpu.memory_space<vmem>>, vector<8x8xf32>,
    %c0_20 = arith.constant 0 : index
    %c0_21 = arith.constant 0 : index
    %35 = vector.load %arg9[%c0_20, %c0_21] : memref<8x1xf32, #tpu.memory_space<vmem>>, vector<8x1xf32>
    tpu.vector_store %arg9[%c0_20, %c0_21], %33 {strides = array<i32>} : memref<8x1xf32, #tpu.memory_space<vmem>>, vector<8x1xf32>,
    return
  }
  func.func @transform_0(%arg0: i32) -> (i32, i32) {
    %c0_i32 = arith.constant 0 : i32
    %c0_i32_0 = arith.constant 0 : i32
    return %arg0, %c0_i32 : i32, i32
  }
  func.func @transform_1(%arg0: i32) -> (i32, i32) {
    %c0_i32 = arith.constant 0 : i32
    %c0_i32_0 = arith.constant 0 : i32
    %c0_i32_1 = arith.constant 0 : i32
    return %c0_i32, %c0_i32_0 : i32, i32
  }
  func.func @transform_2(%arg0: i32) -> (i32, i32) {
    %c0_i32 = arith.constant 0 : i32
    %c0_i32_0 = arith.constant 0 : i32
    %c0_i32_1 = arith.constant 0 : i32
    return %c0_i32, %c0_i32_0 : i32, i32
  }
  func.func @transform_3(%arg0: i32) -> (i32, i32) {
    %c0_i32 = arith.constant 0 : i32
    %c0_i32_0 = arith.constant 0 : i32
    %c0_i32_1 = arith.constant 0 : i32
    return %c0_i32, %c0_i32_0 : i32, i32
  }
  func.func @transform_4(%arg0: i32) -> (i32, i32) {
    %c0_i32 = arith.constant 0 : i32
    %c0_i32_0 = arith.constant 0 : i32
    %c0_i32_1 = arith.constant 0 : i32
    return %c0_i32, %c0_i32_0 : i32, i32
  }
  func.func @transform_5(%arg0: i32) -> (i32, i32) {
    %c0_i32 = arith.constant 0 : i32
    %c0_i32_0 = arith.constant 0 : i32
    %c0_i32_1 = arith.constant 0 : i32
    return %c0_i32, %c0_i32_0 : i32, i32
  }
  func.func @transform_6(%arg0: i32) -> (i32, i32) {
    %c0_i32 = arith.constant 0 : i32
    %c0_i32_0 = arith.constant 0 : i32
    %c0_i32_1 = arith.constant 0 : i32
    return %c0_i32, %c0_i32_0 : i32, i32
  }
  func.func @transform_7(%arg0: i32) -> (i32, i32) {
    %c0_i32 = arith.constant 0 : i32
    %c0_i32_0 = arith.constant 0 : i32
    return %arg0, %c0_i32 : i32, i32
  }
  func.func @transform_8(%arg0: i32) -> (i32, i32) {
    %c0_i32 = arith.constant 0 : i32
    %c0_i32_0 = arith.constant 0 : i32
    return %arg0, %c0_i32 : i32, i32
  }
}

</mosaic_0001>

<llo_original>
// kernel: tpu_custom_call.1
$region0: #{tpu_custom_call.1}
  #allocation0 [shape = 'u32[]', space=smem, size = 0x4, offset = 0x4, fixed_abs, tag = 'smem constant byte address 0x4 - core index']
  #allocation1 [shape = 'u32[72,128]{1,0:T(1,128)}', space=vmem, size = 0x9000, scoped, tag = 'internal scratch']
  %s0 = inlined_call_operand.vmem [shape: f32[16,8], index: 0, kind: input, shape index: {}]
  %s1 = inlined_call_operand.vmem [shape: f32[8,64], index: 1, kind: input, shape index: {}]
  %s2 = inlined_call_operand.vmem [shape: f32[1,64], index: 2, kind: input, shape index: {}]
  %s3 = inlined_call_operand.vmem [shape: f32[64,64], index: 3, kind: input, shape index: {}]
  %s4 = inlined_call_operand.vmem [shape: f32[1,64], index: 4, kind: input, shape index: {}]
  %s5 = inlined_call_operand.vmem [shape: f32[64,16], index: 5, kind: input, shape index: {}]
  %s6 = inlined_call_operand.vmem [shape: f32[1,16], index: 6, kind: input, shape index: {}]
  %s7 = inlined_call_operand.vmem [shape: f32[16,8], index: 7, kind: output, shape index: {0}]
  %s8 = inlined_call_operand.vmem [shape: f32[16,1], index: 8, kind: output, shape index: {1}]
  %9 = xla_tuple %s7, %s8
  %s10 = sld [smem:[#allocation0]]
  $region69: #{tpu_custom_call.1} parent=0
    _
  %s12 = ssub.s32 1, %s10
  %s13 = scalar_select 0, %s12, %s10
  loop: start=0, step=1, limit=4
  $region2: #{tpu_custom_call.1} parent=0 // loop_pre_header
    _
  $region3: #{tpu_custom_call.1} parent=0 // loop_header
    %s15 = sphi 0, %s19
    %p16 = scmp.ge.s32.totalorder %s15, 4
    %s25 = sphi 0, %s27
    %s28 = sphi 0, %s25
    %s29 = sphi 0, %s28
    %s45 = sphi 0, %s29
    %s49 = sphi 0, %s49
    %s51 = sphi 0, %s49
    %s52 = sphi 0, %s51
    %s66 = sphi 0, %s52
    %s70 = sphi 0, %s70
    %s72 = sphi 0, %s70
    %s73 = sphi 0, %s72
    %s87 = sphi 0, %s73
    %s91 = sphi 0, %s91
    %s93 = sphi 0, %s91
    %s94 = sphi 0, %s93
    %s108 = sphi 0, %s94
    %s112 = sphi 0, %s112
    %s114 = sphi 0, %s112
    %s115 = sphi 0, %s114
    %s129 = sphi 0, %s115
    %s133 = sphi 0, %s133
    %s135 = sphi 0, %s133
    %s136 = sphi 0, %s135
    %s150 = sphi 0, %s136
    %s154 = sphi 0, %s154
    %s156 = sphi 0, %s154
    %s157 = sphi 0, %s156
    %s171 = sphi 0, %s157
    %s177 = sphi 0, %s179
    %s180 = sphi 0, %s177
    %s181 = sphi 0, %s180
    %s197 = sphi 0, %s181
    %s203 = sphi 0, %s205
    %s206 = sphi 0, %s203
    %s207 = sphi 0, %s206
    %s223 = sphi 0, %s207
  $region4: #{tpu_custom_call.1} parent=0 // loop_header_branch
    %18 = sbr.rel (%p16) target = $region8
  $region5: #{tpu_custom_call.1} parent=0 // loop_body
    %s20 = ssub.s32 %s15, 1
    %s21 = ssub.s32 %s15, 2
    %s22 = sadd.s32 %s15, 1
    %s23 = ssub.s32 %s15, %s22
    %p24 = scmp.eq.s32.totalorder %s23, 0
    %s26 = sadd.s32 %s25, 1
    %s27 = scalar_select %p24, %s25, %s26
    %p30 = pneg %p24
    %p31 = scmp.eq.s32.totalorder %s15, 1
    %p32 = por %p30, %p31
    %p33 = scmp.ne.s32.totalorder %s25, %s28
    %p34 = scmp.eq.s32.totalorder %s15, 0
    %p35 = por %p33, %p34
    %p36 = scmp.ne.s32.totalorder %s25, %s28
    %p37 = scmp.eq.s32.totalorder %s20, 1
    %p38 = por %p36, %p37
    %p39 = scmp.ne.s32.totalorder %s28, %s29
    %p40 = scmp.eq.s32.totalorder %s20, 0
    %p41 = por %p39, %p40
    %p42 = scmp.ne.s32.totalorder %s28, %s29
    %p43 = scmp.eq.s32.totalorder %s21, 1
    %p44 = por %p42, %p43
    %p46 = scmp.ne.s32.totalorder %s29, %s45
    %p47 = scmp.eq.s32.totalorder %s21, 0
    %p48 = por %p46, %p47
    %s50 = sadd.s32 %s49, 1
    %p53 = scmp.eq.s32.totalorder %s15, 1
    %p54 = scmp.ne.s32.totalorder %s49, %s51
    %p55 = scmp.eq.s32.totalorder %s15, 0
    %p56 = por %p54, %p55
    %p57 = scmp.ne.s32.totalorder %s49, %s51
    %p58 = scmp.eq.s32.totalorder %s20, 1
    %p59 = por %p57, %p58
    %p60 = scmp.ne.s32.totalorder %s51, %s52
    %p61 = scmp.eq.s32.totalorder %s20, 0
    %p62 = por %p60, %p61
    %p63 = scmp.ne.s32.totalorder %s51, %s52
    %p64 = scmp.eq.s32.totalorder %s21, 1
    %p65 = por %p63, %p64
    %p67 = scmp.ne.s32.totalorder %s52, %s66
    %p68 = scmp.eq.s32.totalorder %s21, 0
    %p69 = por %p67, %p68
    %s71 = sadd.s32 %s70, 1
    %p74 = scmp.eq.s32.totalorder %s15, 1
    %p75 = scmp.ne.s32.totalorder %s70, %s72
    %p76 = scmp.eq.s32.totalorder %s15, 0
    %p77 = por %p75, %p76
    %p78 = scmp.ne.s32.totalorder %s70, %s72
    %p79 = scmp.eq.s32.totalorder %s20, 1
    %p80 = por %p78, %p79
    %p81 = scmp.ne.s32.totalorder %s72, %s73
    %p82 = scmp.eq.s32.totalorder %s20, 0
    %p83 = por %p81, %p82
    %p84 = scmp.ne.s32.totalorder %s72, %s73
    %p85 = scmp.eq.s32.totalorder %s21, 1
    %p86 = por %p84, %p85
    %p88 = scmp.ne.s32.totalorder %s73, %s87
    %p89 = scmp.eq.s32.totalorder %s21, 0
    %p90 = por %p88, %p89
    %s92 = sadd.s32 %s91, 1
    %p95 = scmp.eq.s32.totalorder %s15, 1
    %p96 = scmp.ne.s32.totalorder %s91, %s93
    %p97 = scmp.eq.s32.totalorder %s15, 0
    %p98 = por %p96, %p97
    %p99 = scmp.ne.s32.totalorder %s91, %s93
    %p100 = scmp.eq.s32.totalorder %s20, 1
    %p101 = por %p99, %p100
    %p102 = scmp.ne.s32.totalorder %s93, %s94
    %p103 = scmp.eq.s32.totalorder %s20, 0
    %p104 = por %p102, %p103
    %p105 = scmp.ne.s32.totalorder %s93, %s94
    %p106 = scmp.eq.s32.totalorder %s21, 1
    %p107 = por %p105, %p106
    %p109 = scmp.ne.s32.totalorder %s94, %s108
    %p110 = scmp.eq.s32.totalorder %s21, 0
    %p111 = por %p109, %p110
    %s113 = sadd.s32 %s112, 1
    %p116 = scmp.eq.s32.totalorder %s15, 1
    %p117 = scmp.ne.s32.totalorder %s112, %s114
    %p118 = scmp.eq.s32.totalorder %s15, 0
    %p119 = por %p117, %p118
    %p120 = scmp.ne.s32.totalorder %s112, %s114
    %p121 = scmp.eq.s32.totalorder %s20, 1
    %p122 = por %p120, %p121
    %p123 = scmp.ne.s32.totalorder %s114, %s115
    %p124 = scmp.eq.s32.totalorder %s20, 0
    %p125 = por %p123, %p124
    %p126 = scmp.ne.s32.totalorder %s114, %s115
    %p127 = scmp.eq.s32.totalorder %s21, 1
    %p128 = por %p126, %p127
    %p130 = scmp.ne.s32.totalorder %s115, %s129
    %p131 = scmp.eq.s32.totalorder %s21, 0
    %p132 = por %p130, %p131
    %s134 = sadd.s32 %s133, 1
    %p137 = scmp.eq.s32.totalorder %s15, 1
    %p138 = scmp.ne.s32.totalorder %s133, %s135
    %p139 = scmp.eq.s32.totalorder %s15, 0
    %p140 = por %p138, %p139
    %p141 = scmp.ne.s32.totalorder %s133, %s135
    %p142 = scmp.eq.s32.totalorder %s20, 1
    %p143 = por %p141, %p142
    %p144 = scmp.ne.s32.totalorder %s135, %s136
    %p145 = scmp.eq.s32.totalorder %s20, 0
    %p146 = por %p144, %p145
    %p147 = scmp.ne.s32.totalorder %s135, %s136
    %p148 = scmp.eq.s32.totalorder %s21, 1
    %p149 = por %p147, %p148
    %p151 = scmp.ne.s32.totalorder %s136, %s150
    %p152 = scmp.eq.s32.totalorder %s21, 0
    %p153 = por %p151, %p152
    %s155 = sadd.s32 %s154, 1
    %p158 = scmp.eq.s32.totalorder %s15, 1
    %p159 = scmp.ne.s32.totalorder %s154, %s156
    %p160 = scmp.eq.s32.totalorder %s15, 0
    %p161 = por %p159, %p160
    %p162 = scmp.ne.s32.totalorder %s154, %s156
    %p163 = scmp.eq.s32.totalorder %s20, 1
    %p164 = por %p162, %p163
    %p165 = scmp.ne.s32.totalorder %s156, %s157
    %p166 = scmp.eq.s32.totalorder %s20, 0
    %p167 = por %p165, %p166
    %p168 = scmp.ne.s32.totalorder %s156, %s157
    %p169 = scmp.eq.s32.totalorder %s21, 1
    %p170 = por %p168, %p169
    %p172 = scmp.ne.s32.totalorder %s157, %s171
    %p173 = scmp.eq.s32.totalorder %s21, 0
    %p174 = por %p172, %p173
    %s175 = ssub.s32 %s15, %s22
    %p176 = scmp.eq.s32.totalorder %s175, 0
    %s178 = sadd.s32 %s177, 1
    %s179 = scalar_select %p176, %s177, %s178
    %p182 = pneg %p176
    %p183 = scmp.eq.s32.totalorder %s15, 1
    %p184 = por %p182, %p183
    %p185 = scmp.ne.s32.totalorder %s177, %s180
    %p186 = scmp.eq.s32.totalorder %s15, 0
    %p187 = por %p185, %p186
    %p188 = scmp.ne.s32.totalorder %s177, %s180
    %p189 = scmp.eq.s32.totalorder %s20, 1
    %p190 = por %p188, %p189
    %p191 = scmp.ne.s32.totalorder %s180, %s181
    %p192 = scmp.eq.s32.totalorder %s20, 0
    %p193 = por %p191, %p192
    %p194 = scmp.ne.s32.totalorder %s180, %s181
    %p195 = scmp.eq.s32.totalorder %s21, 1
    %p196 = por %p194, %p195
    %p198 = scmp.ne.s32.totalorder %s181, %s197
    %p199 = scmp.eq.s32.totalorder %s21, 0
    %p200 = por %p198, %p199
    %s201 = ssub.s32 %s15, %s22
    %p202 = scmp.eq.s32.totalorder %s201, 0
    %s204 = sadd.s32 %s203, 1
    %s205 = scalar_select %p202, %s203, %s204
    %p208 = pneg %p202
    %p209 = scmp.eq.s32.totalorder %s15, 1
    %p210 = por %p208, %p209
    %p211 = scmp.ne.s32.totalorder %s203, %s206
    %p212 = scmp.eq.s32.totalorder %s15, 0
    %p213 = por %p211, %p212
    %p214 = scmp.ne.s32.totalorder %s203, %s206
    %p215 = scmp.eq.s32.totalorder %s20, 1
    %p216 = por %p214, %p215
    %p217 = scmp.ne.s32.totalorder %s206, %s207
    %p218 = scmp.eq.s32.totalorder %s20, 0
    %p219 = por %p217, %p218
    %p220 = scmp.ne.s32.totalorder %s206, %s207
    %p221 = scmp.eq.s32.totalorder %s21, 1
    %p222 = por %p220, %p221
    %p224 = scmp.ne.s32.totalorder %s207, %s223
    %p225 = scmp.eq.s32.totalorder %s21, 0
    %p226 = por %p224, %p225
    %p227 = scmp.le.s32.totalorder 1, %s15
    %p228 = scmp.lt.s32.totalorder %s15, 3
    %p229 = pnand %p227, %p228
    %p230 = pneg %p229
    // Predicated region
    $region9: #{tpu_custom_call.1} parent=5 // pred_check
      _
    $region10: #{tpu_custom_call.1} parent=5 // pred_check_branch
      %232 = sbr.rel (%p229) target = $region12
    $region11: #{tpu_custom_call.1} parent=5 // pred_region
      %s233 = ssub.s32 %s15, 1
      // Predicated region
      $region13: #{tpu_custom_call.1} parent=11 // pred_check
        %p234 = pneg %p62
      $region14: #{tpu_custom_call.1} parent=11 // pred_check_branch
        %236 = sbr.rel (%p234) target = $region16
      $region15: #{tpu_custom_call.1} parent=11 // pred_region
        _
      $region16: #{tpu_custom_call.1} parent=11 // pred_fallthru
        _
      // Predicated region
      $region17: #{tpu_custom_call.1} parent=11 // pred_check
        %p237 = pneg %p83
      $region18: #{tpu_custom_call.1} parent=11 // pred_check_branch
        %239 = sbr.rel (%p237) target = $region20
      $region19: #{tpu_custom_call.1} parent=11 // pred_region
        _
      $region20: #{tpu_custom_call.1} parent=11 // pred_fallthru
        _
      // Predicated region
      $region21: #{tpu_custom_call.1} parent=11 // pred_check
        %p240 = pneg %p104
      $region22: #{tpu_custom_call.1} parent=11 // pred_check_branch
        %242 = sbr.rel (%p240) target = $region24
      $region23: #{tpu_custom_call.1} parent=11 // pred_region
        _
      $region24: #{tpu_custom_call.1} parent=11 // pred_fallthru
        _
      // Predicated region
      $region25: #{tpu_custom_call.1} parent=11 // pred_check
        %p243 = pneg %p125
      $region26: #{tpu_custom_call.1} parent=11 // pred_check_branch
        %245 = sbr.rel (%p243) target = $region28
      $region27: #{tpu_custom_call.1} parent=11 // pred_region
        _
      $region28: #{tpu_custom_call.1} parent=11 // pred_fallthru
        _
      // Predicated region
      $region29: #{tpu_custom_call.1} parent=11 // pred_check
        %p246 = pneg %p146
      $region30: #{tpu_custom_call.1} parent=11 // pred_check_branch
        %248 = sbr.rel (%p246) target = $region32
      $region31: #{tpu_custom_call.1} parent=11 // pred_region
        _
      $region32: #{tpu_custom_call.1} parent=11 // pred_fallthru
        _
      // Predicated region
      $region33: #{tpu_custom_call.1} parent=11 // pred_check
        %p249 = pneg %p167
      $region34: #{tpu_custom_call.1} parent=11 // pred_check_branch
        %251 = sbr.rel (%p249) target = $region36
      $region35: #{tpu_custom_call.1} parent=11 // pred_region
        _
      $region36: #{tpu_custom_call.1} parent=11 // pred_fallthru
        _
    $region12: #{tpu_custom_call.1} parent=5 // pred_fallthru
      _
    %p252 = scmp.lt.s32.totalorder %s15, 2
    // Predicated region
    $region37: #{tpu_custom_call.1} parent=5 // pred_check
      %p253 = pneg %p252
    $region38: #{tpu_custom_call.1} parent=5 // pred_check_branch
      %255 = sbr.rel (%p253) target = $region40
    $region39: #{tpu_custom_call.1} parent=5 // pred_region
      // Predicated region
      $region41: #{tpu_custom_call.1} parent=39 // pred_check
        %p256 = pneg %p35
      $region42: #{tpu_custom_call.1} parent=39 // pred_check_branch
        %258 = sbr.rel (%p256) target = $region44
      $region43: #{tpu_custom_call.1} parent=39 // pred_region
        %p259 = scmp.lt.s32.totalorder %s15, 1
        %s260 = scalar_select %p259, %s15, 1
        %s261 = smul.addr %s260, 8
        %s262 = scalar_lea.vmem %s0, %s261
      $region44: #{tpu_custom_call.1} parent=39 // pred_fallthru
        _
    $region40: #{tpu_custom_call.1} parent=5 // pred_fallthru
      _
    %p263 = scmp.le.s32.totalorder 1, %s15
    %p264 = scmp.lt.s32.totalorder %s15, 3
    %p265 = pnand %p263, %p264
    %p266 = pneg %p265
    // Predicated region
    $region45: #{tpu_custom_call.1} parent=5 // pred_check
      _
    $region46: #{tpu_custom_call.1} parent=5 // pred_check_branch
      %268 = sbr.rel (%p265) target = $region48
    $region47: #{tpu_custom_call.1} parent=5 // pred_region
      %s269 = ssub.s32 %s15, 1
      %p270 = scmp.lt.s32.totalorder %s20, 1
      %s271 = scalar_select %p270, %s20, 1
      %s272 = smul.addr %s271, 8
      %s273 = scalar_lea.vmem %s0, %s272
      %p274 = pneg %p41
      %p275 = pneg %p38
      %p276 = pneg %p62
      %p277 = pneg %p59
      %p278 = pneg %p83
      %p279 = pneg %p80
      %p280 = pneg %p104
      %p281 = pneg %p101
      %p282 = pneg %p125
      %p283 = pneg %p122
      %p284 = pneg %p146
      %p285 = pneg %p143
      %p286 = pneg %p167
      %p287 = pneg %p164
      %p288 = pneg %p193
      %p289 = pneg %p190
      %p290 = scmp.lt.s32.totalorder %s20, 1
      %s291 = scalar_select %p290, %s20, 1
      %s292 = smul.addr %s291, 8
      %s293 = scalar_lea.vmem %s7, %s292
      %p294 = pneg %p219
      %p295 = pneg %p216
      %p296 = scmp.lt.s32.totalorder %s20, 1
      %s297 = scalar_select %p296, %s20, 1
      %s298 = smul.addr %s297, 8
      %s299 = scalar_lea.vmem %s8, %s298
      %p300 = scmp.lt.s32.totalorder %s20, 1
      %s301 = scalar_select %p300, %s20, 1
      %s302 = smul.addr %s301, 8
      %s303 = scalar_lea.vmem %s0, %s302
      %p304 = scmp.lt.s32.totalorder %s20, 1
      %s305 = scalar_select %p304, %s20, 1
      %s306 = smul.addr %s305, 8
      %s307 = scalar_lea.vmem %s7, %s306
      %p308 = scmp.lt.s32.totalorder %s20, 1
      %s309 = scalar_select %p308, %s20, 1
      %s310 = smul.addr %s309, 8
      %s311 = scalar_lea.vmem %s8, %s310
      %v312 = vld [vmem:[%s303] sm:$0xff]
      %v313 = vlaneseq
      %v314 = vand.u32 %v313, 127
      %vm315 = vcmp.lt.s32.totalorder %v314, 32
      %v316 = vld [vmem:[%s1] sm:$0xff]
      %v317 = vld [vmem:[%s2] sm:$0x1]
      %v319 = vperm.slane %v317, 0
      %vm321 = vcmask 64512
      %v323 = vsel %vm321, %v312, 0
      %325 = vmatpush.msra.mxu0 0.0
      %326 = vmatpush.msra.mxu0 0.0
      %327 = vmatpush.msra.mxu0 0.0
      %328 = vmatpush.msra.mxu0 0.0
      %329 = vmatpush.msra.mxu0 0.0
      %330 = vmatpush.msra.mxu0 0.0
      %331 = vmatpush.msra.mxu0 0.0
      %332 = vmatpush.msra.mxu0 0.0
      %333 = vmatpush.msra.mxu0 0.0
      %334 = vmatpush.msra.mxu0 0.0
      %335 = vmatpush.msra.mxu0 0.0
      %336 = vmatpush.msra.mxu0 0.0
      %337 = vmatpush.msra.mxu0 0.0
      %338 = vmatpush.msra.mxu0 0.0
      %339 = vmatpush.msra.mxu0 0.0
      %340 = vmatpush.msra.mxu0 %v316
      %341 = vmatmul.f32.gmra.mxu0 %v323
      %v342 = vpop.f32.mrf.mxu0
      %v343 = vadd.f32 %v319, %v342
      %344 = vdwg.mxu0
      %v345 = vtanh.pop %v343
      %v346 = vmax.f32 %v343, 0.0
      %v347 = vsel %vm315, %v345, %v346
      %v348 = vld [vmem:[%s3] sm:$0xff]
      %v349 = vld [vmem:[%s3 + $0x8] sm:$0xff]
      %v350 = vld [vmem:[%s3 + $0x10] sm:$0xff]
      %v351 = vld [vmem:[%s3 + $0x18] sm:$0xff]
      %v352 = vld [vmem:[%s3 + $0x20] sm:$0xff]
      %v353 = vld [vmem:[%s3 + $0x28] sm:$0xff]
      %v354 = vld [vmem:[%s3 + $0x30] sm:$0xff]
      %v355 = vld [vmem:[%s3 + $0x38] sm:$0xff]
      %v356 = vld [vmem:[%s4] sm:$0x1]
      %v358 = vperm.slane %v356, 0
      %vm360 = vcmask 523264
      %v362 = vsel %vm360, %v347, 0
      %364 = vmatpush.msra.mxu0 0.0
      %365 = vmatpush.msra.mxu0 0.0
      %366 = vmatpush.msra.mxu0 0.0
      %367 = vmatpush.msra.mxu0 0.0
      %368 = vmatpush.msra.mxu0 0.0
      %369 = vmatpush.msra.mxu0 0.0
      %370 = vmatpush.msra.mxu0 0.0
      %371 = vmatpush.msra.mxu0 0.0
      %372 = vmatpush.msra.mxu0 %v355
      %373 = vmatpush.msra.mxu0 %v354
      %374 = vmatpush.msra.mxu0 %v353
      %375 = vmatpush.msra.mxu0 %v352
      %376 = vmatpush.msra.mxu0 %v351
      %377 = vmatpush.msra.mxu0 %v350
      %378 = vmatpush.msra.mxu0 %v349
      %379 = vmatpush.msra.mxu0 %v348
      %380 = vmatmul.f32.gmra.mxu0 %v362
      %v381 = vpop.f32.mrf.mxu0
      %v382 = vadd.f32 %v358, %v381
      %383 = vdwg.mxu0
      %v384 = vtanh.pop %v382
      %v385 = vmax.f32 %v382, 0.0
      %v386 = vsel %vm315, %v384, %v385
      %v387 = vld [vmem:[%s5] sm:$0xff]
      %v388 = vld [vmem:[%s5 + $0x8] sm:$0xff]
      %v389 = vld [vmem:[%s5 + $0x10] sm:$0xff]
      %v390 = vld [vmem:[%s5 + $0x18] sm:$0xff]
      %v391 = vld [vmem:[%s5 + $0x20] sm:$0xff]
      %v392 = vld [vmem:[%s5 + $0x28] sm:$0xff]
      %v393 = vld [vmem:[%s5 + $0x30] sm:$0xff]
      %v394 = vld [vmem:[%s5 + $0x38] sm:$0xff]
      %v395 = vld [vmem:[%s6] sm:$0x1]
      %v397 = vperm.slane %v395, 0
      %v400 = vsel %vm360, %v386, 0
      %402 = vmatpush.msra.mxu0 0.0
      %403 = vmatpush.msra.mxu0 0.0
      %404 = vmatpush.msra.mxu0 0.0
      %405 = vmatpush.msra.mxu0 0.0
      %406 = vmatpush.msra.mxu0 0.0
      %407 = vmatpush.msra.mxu0 0.0
      %408 = vmatpush.msra.mxu0 0.0
      %409 = vmatpush.msra.mxu0 0.0
      %410 = vmatpush.msra.mxu0 %v394
      %411 = vmatpush.msra.mxu0 %v393
      %412 = vmatpush.msra.mxu0 %v392
      %413 = vmatpush.msra.mxu0 %v391
      %414 = vmatpush.msra.mxu0 %v390
      %415 = vmatpush.msra.mxu0 %v389
      %416 = vmatpush.msra.mxu0 %v388
      %417 = vmatpush.msra.mxu0 %v387
      %418 = vmatmul.f32.gmra.mxu0 %v400
      %v419 = vpop.f32.mrf.mxu0
      %v420 = vadd.f32 %v397, %v419
      %421 = vdwg.mxu0
      %v422 = vmul.f32 %v420, 1.442695
      %v423 = vpow.pop %v422
      %v424 = vmul.f32 %v312, %v423
      %426 = vrot.lane.b32.xlu0 %v420, 120
      %v427 = vpop.permute.xlu0 %426
      %v429 = vadd.f32 %v424, %v427
      %v430 = vsel %vm321, %v420, 0.0
      %431 = vadd.xlane.f32.xlu0 %v430
      %v432 = vpop.xlane.xlu0 %431
      %433 = vst.msk [vmem:[%s307] sm:$0xff] %vm321, %v429
      %vm434 = vcmask 7168
      %435 = vst.msk [vmem:[%s311] sm:$0xff] %vm434, %v432
      %p436 = scmp.lt.s32.totalorder %s20, 1
      %s437 = scalar_select %p436, %s20, 1
      %s438 = smul.addr %s437, 8
      %s439 = scalar_lea.vmem %s7, %s438
      %p440 = scmp.lt.s32.totalorder %s20, 1
      %s441 = scalar_select %p440, %s20, 1
      %s442 = smul.addr %s441, 8
      %s443 = scalar_lea.vmem %s8, %s442
      // Predicated region
      $region49: #{tpu_custom_call.1} parent=47 // pred_check
        %p444 = pneg %p190
      $region50: #{tpu_custom_call.1} parent=47 // pred_check_branch
        %446 = sbr.rel (%p444) target = $region52
      $region51: #{tpu_custom_call.1} parent=47 // pred_region
        _
      $region52: #{tpu_custom_call.1} parent=47 // pred_fallthru
        _
      // Predicated region
      $region53: #{tpu_custom_call.1} parent=47 // pred_check
        %p447 = pneg %p216
      $region54: #{tpu_custom_call.1} parent=47 // pred_check_branch
        %449 = sbr.rel (%p447) target = $region56
      $region55: #{tpu_custom_call.1} parent=47 // pred_region
        _
      $region56: #{tpu_custom_call.1} parent=47 // pred_fallthru
        _
    $region48: #{tpu_custom_call.1} parent=5 // pred_fallthru
      _
    %p450 = scmp.le.s32.totalorder 2, %s15
    // Predicated region
    $region57: #{tpu_custom_call.1} parent=5 // pred_check
      %p451 = pneg %p450
    $region58: #{tpu_custom_call.1} parent=5 // pred_check_branch
      %453 = sbr.rel (%p451) target = $region60
    $region59: #{tpu_custom_call.1} parent=5 // pred_region
      %s454 = ssub.s32 %s15, 2
      // Predicated region
      $region61: #{tpu_custom_call.1} parent=59 // pred_check
        %p455 = pneg %p196
      $region62: #{tpu_custom_call.1} parent=59 // pred_check_branch
        %457 = sbr.rel (%p455) target = $region64
      $region63: #{tpu_custom_call.1} parent=59 // pred_region
        %p458 = scmp.lt.s32.totalorder %s21, 1
        %s459 = scalar_select %p458, %s21, 1
        %s460 = smul.addr %s459, 8
        %s461 = scalar_lea.vmem %s7, %s460
      $region64: #{tpu_custom_call.1} parent=59 // pred_fallthru
        _
      // Predicated region
      $region65: #{tpu_custom_call.1} parent=59 // pred_check
        %p462 = pneg %p222
      $region66: #{tpu_custom_call.1} parent=59 // pred_check_branch
        %464 = sbr.rel (%p462) target = $region68
      $region67: #{tpu_custom_call.1} parent=59 // pred_region
        %p465 = scmp.lt.s32.totalorder %s21, 1
        %s466 = scalar_select %p465, %s21, 1
        %s467 = smul.addr %s466, 8
        %s468 = scalar_lea.vmem %s8, %s467
      $region68: #{tpu_custom_call.1} parent=59 // pred_fallthru
        _
    $region60: #{tpu_custom_call.1} parent=5 // pred_fallthru
      _
  $region6: #{tpu_custom_call.1} parent=0 // loop_footer
    %s19 = sadd.s32 1, %s15
  $region7: #{tpu_custom_call.1} parent=0 // loop_footer_branch
    %14 = sbr.rel target = $region3
  $region8: #{tpu_custom_call.1} parent=0 // loop_exit
    _

</llo_original>
